<compile_context>
chip_gen: v7x
topology: tpu7x:2x2x1
jax: 0.10.0
libtpu: 0.0.40
codegen_flags: <defaults>
</compile_context>

<pallas_src>
import functools

import jax
import jax.numpy as jnp
from jax.experimental import pallas as pl
from jax.experimental.pallas import tpu as pltpu

HIDDEN = 256
LANE = 128
SUBLANE = 16  # bf16 sublane packing granularity; round batch tiles to this.


def _round_up(x, m):
    return ((x + m - 1) // m) * m


def actor_kernel(s_ref, w1_ref, b1_ref, w2_ref, b2_ref, w3_ref, b3_ref,
                 o_ref, *, max_action, bf16_epilogue):
    """One batch tile: 3 matmuls (f32 MXU accumulation) + bias/ReLU/tanh."""
    wdt = w1_ref.dtype            # bf16 weight / activation dtype
    adim = o_ref.shape[1]         # true action_dim (output stays unpadded)

    def bias_relu(acc_f32, b_ref):
        if bf16_epilogue:
            # bf16 epilogue: half the VALU work on v6e/v7x packed-bf16 VALUs.
            return jnp.maximum(acc_f32.astype(wdt) + b_ref[...].astype(wdt), 0)
        # f32 epilogue (v5e has no bf16 VPU); cast once for the next matmul.
        return jnp.maximum(acc_f32 + b_ref[...], 0.0).astype(wdt)

    # layer 1: (tb, k_pad) @ (k_pad, 256)
    h1 = bias_relu(
        jnp.dot(s_ref[...], w1_ref[...], preferred_element_type=jnp.float32),
        b1_ref)
    # layer 2: (tb, 256) @ (256, 256)
    h2 = bias_relu(
        jnp.dot(h1, w2_ref[...], preferred_element_type=jnp.float32),
        b2_ref)
    # layer 3: (tb, 256) @ (256, n_pad); slice to action_dim BEFORE bias/tanh so
    # the EUP tanh and the HBM store only touch the useful lanes.
    a = jnp.dot(h2, w3_ref[...], preferred_element_type=jnp.float32)
    a = a[:, :adim] + b3_ref[...]
    o_ref[...] = (max_action * jnp.tanh(a)).astype(o_ref.dtype)


def init_actor_params(key, state_dim, action_dim, hidden=HIDDEN):
    """nn.Linear-style init, stored as [in, out] so the kernel does x @ W."""
    def linear(k, fan_in, fan_out):
        kw, kb = jax.random.split(k)
        bound = 1.0 / jnp.sqrt(fan_in)
        w = jax.random.uniform(kw, (fan_in, fan_out), jnp.float32, -bound, bound)
        b = jax.random.uniform(kb, (1, fan_out), jnp.float32, -bound, bound)
        return w, b

    k1, k2, k3 = jax.random.split(key, 3)
    w1, b1 = linear(k1, state_dim, hidden)
    w2, b2 = linear(k2, hidden, hidden)
    w3, b3 = linear(k3, hidden, action_dim)
    return {"w1": w1, "b1": b1, "w2": w2, "b2": b2, "w3": w3, "b3": b3}


def prepare_actor_params(params, weight_dtype=jnp.bfloat16):
    """One-time prep: lane-pad K (state_dim) and the layer-3 weight's N to 128
    and cast weights to bf16.  Biases stay f32 (cast in-kernel if needed)."""
    state_dim = params["w1"].shape[0]
    action_dim = params["w3"].shape[1]
    k_pad = _round_up(state_dim, LANE)
    n_pad = _round_up(action_dim, LANE)

    w1 = jnp.zeros((k_pad, HIDDEN), weight_dtype).at[:state_dim, :].set(
        params["w1"].astype(weight_dtype))
    w2 = params["w2"].astype(weight_dtype)
    w3 = jnp.zeros((HIDDEN, n_pad), weight_dtype).at[:, :action_dim].set(
        params["w3"].astype(weight_dtype))
    b1 = params["b1"].astype(jnp.float32)
    b2 = params["b2"].astype(jnp.float32)
    b3 = params["b3"].astype(jnp.float32)          # unpadded (1, action_dim)
    return {"w1": w1, "b1": b1, "w2": w2, "b2": b2, "w3": w3, "b3": b3,
            "state_dim": state_dim, "action_dim": action_dim,
            "k_pad": k_pad, "n_pad": n_pad}


def _choose_tiling(B, tile_b, split_threshold=512):
    """Pick (padded batch, batch tile).  Medium batches split into 2 tiles so
    the "parallel" grid axis feeds both v7x TensorCores."""
    tile_b = _round_up(tile_b, SUBLANE)
    bp = _round_up(max(B, 1), SUBLANE)
    if bp <= tile_b:
        if bp >= split_threshold:
            tb = _round_up((bp + 1) // 2, SUBLANE)   # 2 tiles -> megacore split
            bp = 2 * tb
        else:
            tb = bp                                  # tiny batch: single tile
    else:
        tb = tile_b
        bp = _round_up(bp, tb)
    return bp, tb


@functools.partial(jax.jit,
                   static_argnames=("max_action", "tile_b", "bf16_epilogue"))
def _actor_forward_jit(state, w1, b1, w2, b2, w3, b3, *,
                       max_action, tile_b, bf16_epilogue):
    B, state_dim = state.shape
    k_pad, hidden = w1.shape
    n_pad = w3.shape[1]
    action_dim = b3.shape[1]
    wdt = w1.dtype

    bp, tb = _choose_tiling(B, tile_b)

    # Pad rows to the tile grid and lanes to k_pad, in bf16 (half the input
    # HBM bytes of the old f32 staging buffer).  Fused by XLA under jit.
    s = jnp.pad(state.astype(wdt), ((0, bp - B), (0, k_pad - state_dim)))

    kernel = functools.partial(actor_kernel, max_action=float(max_action),
                               bf16_epilogue=bf16_epilogue)

    out = pl.pallas_call(
        kernel,
        out_shape=jax.ShapeDtypeStruct((bp, action_dim), jnp.float32),
        grid_spec=pltpu.PrefetchScalarGridSpec(
            num_scalar_prefetch=0,
            grid=(bp // tb,),
            in_specs=[
                pl.BlockSpec((tb, k_pad), lambda i: (i, 0)),        # state tile
                pl.BlockSpec((k_pad, hidden), lambda i: (0, 0)),    # w1 (resident)
                pl.BlockSpec((1, hidden), lambda i: (0, 0)),        # b1
                pl.BlockSpec((hidden, hidden), lambda i: (0, 0)),   # w2
                pl.BlockSpec((1, hidden), lambda i: (0, 0)),        # b2
                pl.BlockSpec((hidden, n_pad), lambda i: (0, 0)),    # w3
                pl.BlockSpec((1, action_dim), lambda i: (0, 0)),    # b3
            ],
            out_specs=pl.BlockSpec((tb, action_dim), lambda i: (i, 0)),
        ),
        compiler_params=pltpu.CompilerParams(
            dimension_semantics=("parallel",)),
    )(s, w1, b1, w2, b2, w3, b3)

    return out[:B]


def actor_forward(state, prepped, max_action, *, tile_b=512,
                  bf16_epilogue=True):
    """state: [B, state_dim] -> actions [B, action_dim] (f32).
    Set bf16_epilogue=False on v5e (no bf16 VPU); default path targets v6e/v7x."""
    assert state.shape[1] == prepped["state_dim"]
    return _actor_forward_jit(
        state, prepped["w1"], prepped["b1"], prepped["w2"], prepped["b2"],
        prepped["w3"], prepped["b3"],
        max_action=float(max_action), tile_b=int(tile_b),
        bf16_epilogue=bool(bf16_epilogue))


if __name__ == "__main__":
    key = jax.random.PRNGKey(0)
    k_param, k_state, k_state2 = jax.random.split(key, 3)

    batch = 8
    state_dim = 32
    action_dim = 8
    max_action = 2.0

    params = init_actor_params(k_param, state_dim, action_dim)
    prepped = prepare_actor_params(params)
    state = jax.random.normal(k_state, (batch, state_dim), jnp.float32)

    # --- small batch, default (bf16) epilogue ---
    out = actor_forward(state, prepped, max_action)
    jax.block_until_ready(out)
    assert out.shape == (batch, action_dim)
    assert out.dtype == jnp.float32

    # Reference 1: same-math reference (bf16 weights/activations, f32 acc).
    wdt = jnp.bfloat16
    s_p = jnp.pad(state.astype(wdt), ((0, 0), (0, prepped["k_pad"] - state_dim)))
    acc1 = jnp.dot(s_p, prepped["w1"], preferred_element_type=jnp.float32)
    h1 = jnp.maximum(acc1.astype(wdt) + prepped["b1"].astype(wdt), 0)
    acc2 = jnp.dot(h1, prepped["w2"], preferred_element_type=jnp.float32)
    h2 = jnp.maximum(acc2.astype(wdt) + prepped["b2"].astype(wdt), 0)
    acc3 = jnp.dot(h2, prepped["w3"],
                   preferred_element_type=jnp.float32)[:, :action_dim]
    ref_bf16 = max_action * jnp.tanh(acc3 + prepped["b3"])
    assert jnp.allclose(out, ref_bf16, atol=1e-2, rtol=1e-2)

    # Reference 2: full f32 PyTorch-equivalent math (loose tol for bf16 weights).
    def ref_f32(x):
        r1 = jnp.maximum(x @ params["w1"] + params["b1"], 0.0)
        r2 = jnp.maximum(r1 @ params["w2"] + params["b2"], 0.0)
        return max_action * jnp.tanh(r2 @ params["w3"] + params["b3"])

    assert jnp.allclose(out, ref_f32(state), atol=5e-2, rtol=5e-2)

    # --- v5e-style f32 epilogue path ---
    out_f32ep = actor_forward(state, prepped, max_action, bf16_epilogue=False)
    jax.block_until_ready(out_f32ep)
    assert jnp.allclose(out_f32ep, ref_f32(state), atol=5e-2, rtol=5e-2)

    # --- larger batch: exercises row padding + multi-tile "parallel" grid ---
    batch2 = 530
    state2 = jax.random.normal(k_state2, (batch2, state_dim), jnp.float32)
    out2 = actor_forward(state2, prepped, max_action)
    jax.block_until_ready(out2)
    assert out2.shape == (batch2, action_dim)
    assert jnp.allclose(out2, ref_f32(state2), atol=5e-2, rtol=5e-2)

    print("KERNEL_OK")
</pallas_src>

<mosaic_0001>
module attributes {stable_mosaic.version = 11 : i64} {
  func.func @actor_kernel(%arg0: i32, %arg1: memref<16x128xbf16, #tpu.memory_space<vmem>>, %arg2: memref<128x256xbf16, #tpu.memory_space<vmem>>, %arg3: memref<1x256xf32, #tpu.memory_space<vmem>>, %arg4: memref<256x256xbf16, #tpu.memory_space<vmem>>, %arg5: memref<1x256xf32, #tpu.memory_space<vmem>>, %arg6: memref<256x128xbf16, #tpu.memory_space<vmem>>, %arg7: memref<1x8xf32, #tpu.memory_space<vmem>>, %arg8: memref<16x8xf32, #tpu.memory_space<vmem>>) attributes {dimension_semantics = [#tpu.dimension_semantics<parallel>], iteration_bounds = array<i64: 1>, scalar_prefetch = 0 : i64, scratch_operands = 0 : i64, tpu.core_type = #tpu.core_type<tc>, window_params = [{transform_indices = @transform_0, window_bounds = array<i64: 16, 128>}, {pipeline_mode = #tpu.pipeline_mode<synchronous>, transform_indices = @transform_1, window_bounds = array<i64: 128, 256>}, {pipeline_mode = #tpu.pipeline_mode<synchronous>, transform_indices = @transform_2, window_bounds = array<i64: 1, 256>}, {pipeline_mode = #tpu.pipeline_mode<synchronous>, transform_indices = @transform_3, window_bounds = array<i64: 256, 256>}, {pipeline_mode = #tpu.pipeline_mode<synchronous>, transform_indices = @transform_4, window_bounds = array<i64: 1, 256>}, {pipeline_mode = #tpu.pipeline_mode<synchronous>, transform_indices = @transform_5, window_bounds = array<i64: 256, 128>}, {pipeline_mode = #tpu.pipeline_mode<synchronous>, transform_indices = @transform_6, window_bounds = array<i64: 1, 8>}, {transform_indices = @transform_7, window_bounds = array<i64: 16, 8>}]} {
    %c0 = arith.constant 0 : index
    %c0_0 = arith.constant 0 : index
    %0 = vector.load %arg1[%c0, %c0_0] : memref<16x128xbf16, #tpu.memory_space<vmem>>, vector<16x128xbf16>
    %c0_1 = arith.constant 0 : index
    %c0_2 = arith.constant 0 : index
    %1 = vector.load %arg2[%c0_1, %c0_2] : memref<128x256xbf16, #tpu.memory_space<vmem>>, vector<128x256xbf16>
    %cst = arith.constant dense<0.000000e+00> : vector<16x256xf32>
    %2 = tpu.matmul %0, %1, %cst {dimension_numbers = #tpu.dot_dimension_numbers<[1], [0], [0], [1], [0, 0, 1, 1], [], []>} : vector<16x128xbf16>, vector<128x256xbf16>, vector<16x256xf32> -> vector<16x256xf32>
    %3 = arith.truncf %2 : vector<16x256xf32> to vector<16x256xbf16>
    %c0_3 = arith.constant 0 : index
    %c0_4 = arith.constant 0 : index
    %4 = vector.load %arg3[%c0_3, %c0_4] : memref<1x256xf32, #tpu.memory_space<vmem>>, vector<1x256xf32>
    %5 = arith.truncf %4 : vector<1x256xf32> to vector<1x256xbf16>
    %6 = vector.broadcast %5 : vector<1x256xbf16> to vector<16x256xbf16>
    %7 = arith.addf %3, %6 : vector<16x256xbf16>
    %cst_5 = arith.constant 0.000000e+00 : bf16
    %8 = vector.broadcast %cst_5 : bf16 to vector<16x256xbf16>
    %9 = arith.maximumf %7, %8 : vector<16x256xbf16>
    %c0_6 = arith.constant 0 : index
    %c0_7 = arith.constant 0 : index
    %10 = vector.load %arg4[%c0_6, %c0_7] : memref<256x256xbf16, #tpu.memory_space<vmem>>, vector<256x256xbf16>
    %cst_8 = arith.constant dense<0.000000e+00> : vector<16x256xf32>
    %11 = tpu.matmul %9, %10, %cst_8 {dimension_numbers = #tpu.dot_dimension_numbers<[1], [0], [0], [1], [0, 0, 1, 1], [], []>} : vector<16x256xbf16>, vector<256x256xbf16>, vector<16x256xf32> -> vector<16x256xf32>
    %12 = arith.truncf %11 : vector<16x256xf32> to vector<16x256xbf16>
    %c0_9 = arith.constant 0 : index
    %c0_10 = arith.constant 0 : index
    %13 = vector.load %arg5[%c0_9, %c0_10] : memref<1x256xf32, #tpu.memory_space<vmem>>, vector<1x256xf32>
    %14 = arith.truncf %13 : vector<1x256xf32> to vector<1x256xbf16>
    %15 = vector.broadcast %14 : vector<1x256xbf16> to vector<16x256xbf16>
    %16 = arith.addf %12, %15 : vector<16x256xbf16>
    %cst_11 = arith.constant 0.000000e+00 : bf16
    %17 = vector.broadcast %cst_11 : bf16 to vector<16x256xbf16>
    %18 = arith.maximumf %16, %17 : vector<16x256xbf16>
    %c0_12 = arith.constant 0 : index
    %c0_13 = arith.constant 0 : index
    %19 = vector.load %arg6[%c0_12, %c0_13] : memref<256x128xbf16, #tpu.memory_space<vmem>>, vector<256x128xbf16>
    %cst_14 = arith.constant dense<0.000000e+00> : vector<16x128xf32>
    %20 = tpu.matmul %18, %19, %cst_14 {dimension_numbers = #tpu.dot_dimension_numbers<[1], [0], [0], [1], [0, 0, 1, 1], [], []>} : vector<16x256xbf16>, vector<256x128xbf16>, vector<16x128xf32> -> vector<16x128xf32>
    %21 = vector.extract_strided_slice %20 {offsets = [0, 0], sizes = [16, 8], strides = [1, 1]} : vector<16x128xf32> to vector<16x8xf32>
    %c0_15 = arith.constant 0 : index
    %c0_16 = arith.constant 0 : index
    %22 = vector.load %arg7[%c0_15, %c0_16] : memref<1x8xf32, #tpu.memory_space<vmem>>, vector<1x8xf32>
    %23 = vector.broadcast %22 : vector<1x8xf32> to vector<16x8xf32>
    %24 = arith.addf %21, %23 : vector<16x8xf32>
    %25 = math.tanh %24 : vector<16x8xf32>
    %cst_17 = arith.constant 2.000000e+00 : f32
    %26 = vector.broadcast %cst_17 : f32 to vector<16x8xf32>
    %27 = arith.mulf %26, %25 : vector<16x8xf32>
    %c0_18 = arith.constant 0 : index
    %c0_19 = arith.constant 0 : index
    %28 = vector.load %arg8[%c0_18, %c0_19] : memref<16x8xf32, #tpu.memory_space<vmem>>, vector<16x8xf32>
    tpu.vector_store %arg8[%c0_18, %c0_19], %27 {strides = array<i32>} : memref<16x8xf32, #tpu.memory_space<vmem>>, vector<16x8xf32>,
    return
  }
  func.func @transform_0(%arg0: i32) -> (i32, i32) {
    %c0_i32 = arith.constant 0 : i32
    %c0_i32_0 = arith.constant 0 : i32
    return %arg0, %c0_i32 : i32, i32
  }
  func.func @transform_1(%arg0: i32) -> (i32, i32) {
    %c0_i32 = arith.constant 0 : i32
    %c0_i32_0 = arith.constant 0 : i32
    %c0_i32_1 = arith.constant 0 : i32
    return %c0_i32, %c0_i32_0 : i32, i32
  }
  func.func @transform_2(%arg0: i32) -> (i32, i32) {
    %c0_i32 = arith.constant 0 : i32
    %c0_i32_0 = arith.constant 0 : i32
    %c0_i32_1 = arith.constant 0 : i32
    return %c0_i32, %c0_i32_0 : i32, i32
  }
  func.func @transform_3(%arg0: i32) -> (i32, i32) {
    %c0_i32 = arith.constant 0 : i32
    %c0_i32_0 = arith.constant 0 : i32
    %c0_i32_1 = arith.constant 0 : i32
    return %c0_i32, %c0_i32_0 : i32, i32
  }
  func.func @transform_4(%arg0: i32) -> (i32, i32) {
    %c0_i32 = arith.constant 0 : i32
    %c0_i32_0 = arith.constant 0 : i32
    %c0_i32_1 = arith.constant 0 : i32
    return %c0_i32, %c0_i32_0 : i32, i32
  }
  func.func @transform_5(%arg0: i32) -> (i32, i32) {
    %c0_i32 = arith.constant 0 : i32
    %c0_i32_0 = arith.constant 0 : i32
    %c0_i32_1 = arith.constant 0 : i32
    return %c0_i32, %c0_i32_0 : i32, i32
  }
  func.func @transform_6(%arg0: i32) -> (i32, i32) {
    %c0_i32 = arith.constant 0 : i32
    %c0_i32_0 = arith.constant 0 : i32
    %c0_i32_1 = arith.constant 0 : i32
    return %c0_i32, %c0_i32_0 : i32, i32
  }
  func.func @transform_7(%arg0: i32) -> (i32, i32) {
    %c0_i32 = arith.constant 0 : i32
    %c0_i32_0 = arith.constant 0 : i32
    return %arg0, %c0_i32 : i32, i32
  }
}

</mosaic_0001>

<llo_original>
// kernel: _actor_forward_jit.1
$region0: #{_actor_forward_jit.1}
  #allocation0 [shape = 'u32[]', space=smem, size = 0x4, offset = 0x4, fixed_abs, tag = 'smem constant byte address 0x4 - core index']
  #allocation1 [shape = 'u32[144,128]{1,0:T(1,128)}', space=vmem, size = 0x12000, scoped, tag = 'internal scratch']
  %s0 = inlined_call_operand.vmem [shape: bf16[16,128], index: 0, kind: input, shape index: {}]
  %s1 = inlined_call_operand.hbm [shape: bf16[128,256], index: 1, kind: input, shape index: {}]
  %s2 = inlined_call_operand.vmem [shape: f32[1,256], index: 2, kind: input, shape index: {}]
  %s3 = inlined_call_operand.hbm [shape: bf16[256,256], index: 3, kind: input, shape index: {}]
  %s4 = inlined_call_operand.vmem [shape: f32[1,256], index: 4, kind: input, shape index: {}]
  %s5 = inlined_call_operand.hbm [shape: bf16[256,128], index: 5, kind: input, shape index: {}]
  %s6 = inlined_call_operand.vmem [shape: f32[1,8], index: 6, kind: input, shape index: {}]
  %s7 = inlined_call_operand.vmem [shape: f32[16,8], index: 7, kind: output, shape index: {}]
  %s8 = sld [smem:[#allocation0]]
  $region50: #{_actor_forward_jit.1} parent=0
    _
  %s10 = ssub.s32 1, %s8
  %s11 = scalar_select 0, %s10, %s8
  $region1: #{_actor_forward_jit.1} parent=0
    #allocation2 [shape = 'u8[65536]{0}', space=vmem, size = 0x10000, scoped, tag = 'input window, operand 1, single buffered']
    #allocation3 [shape = 's32[1]{0}', space=sflag, size = 0x4, scoped, tag = 'scoped memory for _actor_forward_jit.1']
    #allocation4 [shape = 'u8[131072]{0}', space=vmem, size = 0x20000, scoped, tag = 'input window, operand 3, single buffered']
    #allocation5 [shape = 's32[1]{0}', space=sflag, size = 0x4, scoped, tag = 'scoped memory for _actor_forward_jit.1']
    #allocation6 [shape = 'u8[65536]{0}', space=vmem, size = 0x10000, scoped, tag = 'input window, operand 5, single buffered']
    %12 = vsyncpa [#allocation3], 0
    %13 = vsyncpa [#allocation5], 0
    // Predicated region
    $region2: #{_actor_forward_jit.1} parent=1 // pred_check
      _
    $region3: #{_actor_forward_jit.1} parent=1 // pred_check_branch
      %15 = sbr.rel (0) target = $region5
    $region4: #{_actor_forward_jit.1} parent=1 // pred_region
      _
    $region5: #{_actor_forward_jit.1} parent=1 // pred_fallthru
      _
    // Predicated region
    $region6: #{_actor_forward_jit.1} parent=1 // pred_check
      _
    $region7: #{_actor_forward_jit.1} parent=1 // pred_check_branch
      %17 = sbr.rel (0) target = $region9
    $region8: #{_actor_forward_jit.1} parent=1 // pred_region
      %s19 = ssub.s32 2048, 2048
      %20 = vsyncadd [#allocation3], %s19
      %s21 = sshll.u32 [#allocation2], 4
      %s22 = int_to_ptr.vmem [resolvable:$true] %s21
      %27 = dma.hbm_to_vmem [thread:$0]  %s1, 2048, %s22, [#allocation3], 128, 128, 8
    $region9: #{_actor_forward_jit.1} parent=1 // pred_fallthru
      _
    // Predicated region
    $region10: #{_actor_forward_jit.1} parent=1 // pred_check
      _
    $region11: #{_actor_forward_jit.1} parent=1 // pred_check_branch
      %29 = sbr.rel (0) target = $region13
    $region12: #{_actor_forward_jit.1} parent=1 // pred_region
      _
    $region13: #{_actor_forward_jit.1} parent=1 // pred_fallthru
      _
    // Predicated region
    $region14: #{_actor_forward_jit.1} parent=1 // pred_check
      _
    $region15: #{_actor_forward_jit.1} parent=1 // pred_check_branch
      %31 = sbr.rel (0) target = $region17
    $region16: #{_actor_forward_jit.1} parent=1 // pred_region
      %s33 = ssub.s32 4096, 4096
      %34 = vsyncadd [#allocation5], %s33
      %s35 = sshll.u32 [#allocation4], 4
      %s36 = int_to_ptr.vmem [resolvable:$true] %s35
      %41 = dma.hbm_to_vmem [thread:$0]  %s3, 4096, %s36, [#allocation5], 128, 128, 8
    $region17: #{_actor_forward_jit.1} parent=1 // pred_fallthru
      _
    // Predicated region
    $region18: #{_actor_forward_jit.1} parent=1 // pred_check
      _
    $region19: #{_actor_forward_jit.1} parent=1 // pred_check_branch
      %43 = sbr.rel (0) target = $region21
    $region20: #{_actor_forward_jit.1} parent=1 // pred_region
      _
    $region21: #{_actor_forward_jit.1} parent=1 // pred_fallthru
      _
    // Predicated region
    $region22: #{_actor_forward_jit.1} parent=1 // pred_check
      _
    $region23: #{_actor_forward_jit.1} parent=1 // pred_check_branch
      %45 = sbr.rel (0) target = $region25
    $region24: #{_actor_forward_jit.1} parent=1 // pred_region
      %s47 = ssub.s32 2048, 2048
      %48 = vsyncadd [#allocation5], %s47
      %s49 = sshll.u32 [#allocation6], 4
      %s50 = int_to_ptr.vmem [resolvable:$true] %s49
      %55 = dma.hbm_to_vmem [thread:$0]  %s5, 2048, %s50, [#allocation5], 64, 64, 4
    $region25: #{_actor_forward_jit.1} parent=1 // pred_fallthru
      _
    // Predicated region
    $region26: #{_actor_forward_jit.1} parent=1 // pred_check
      _
    $region27: #{_actor_forward_jit.1} parent=1 // pred_check_branch
      %57 = sbr.rel (0) target = $region29
    $region28: #{_actor_forward_jit.1} parent=1 // pred_region
      _
    $region29: #{_actor_forward_jit.1} parent=1 // pred_fallthru
      _
    // Predicated region
    $region30: #{_actor_forward_jit.1} parent=1 // pred_check
      _
    $region31: #{_actor_forward_jit.1} parent=1 // pred_check_branch
      %59 = sbr.rel (0) target = $region33
    $region32: #{_actor_forward_jit.1} parent=1 // pred_region
      %60 = dma.done [#allocation3], 2048
    $region33: #{_actor_forward_jit.1} parent=1 // pred_fallthru
      _
    // Predicated region
    $region34: #{_actor_forward_jit.1} parent=1 // pred_check
      _
    $region35: #{_actor_forward_jit.1} parent=1 // pred_check_branch
      %62 = sbr.rel (0) target = $region37
    $region36: #{_actor_forward_jit.1} parent=1 // pred_region
      %63 = dma.done [#allocation5], 4096
    $region37: #{_actor_forward_jit.1} parent=1 // pred_fallthru
      _
    // Predicated region
    $region38: #{_actor_forward_jit.1} parent=1 // pred_check
      _
    $region39: #{_actor_forward_jit.1} parent=1 // pred_check_branch
      %65 = sbr.rel (0) target = $region41
    $region40: #{_actor_forward_jit.1} parent=1 // pred_region
      %66 = dma.done [#allocation5], 2048
    $region41: #{_actor_forward_jit.1} parent=1 // pred_fallthru
      _
    %v68 = vld [vmem:[%s0] sm:$0xf]
    %v69 = vld [vmem:[%s0 + $0x4] sm:$0xf]
    %v70 = vld [vmem:[#allocation2] sm:$0xff]
    %v71 = vld [vmem:[#allocation2 + $0x8] sm:$0xff]
    %v72 = vld [vmem:[#allocation2 + $0x10] sm:$0xff]
    %v73 = vld [vmem:[#allocation2 + $0x18] sm:$0xff]
    %v74 = vld [vmem:[#allocation2 + $0x20] sm:$0xff]
    %v75 = vld [vmem:[#allocation2 + $0x28] sm:$0xff]
    %v76 = vld [vmem:[#allocation2 + $0x30] sm:$0xff]
    %v77 = vld [vmem:[#allocation2 + $0x38] sm:$0xff]
    %v78 = vld [vmem:[#allocation2 + $0x40] sm:$0xff]
    %v79 = vld [vmem:[#allocation2 + $0x48] sm:$0xff]
    %v80 = vld [vmem:[#allocation2 + $0x50] sm:$0xff]
    %v81 = vld [vmem:[#allocation2 + $0x58] sm:$0xff]
    %v82 = vld [vmem:[#allocation2 + $0x60] sm:$0xff]
    %v83 = vld [vmem:[#allocation2 + $0x68] sm:$0xff]
    %v84 = vld [vmem:[#allocation2 + $0x70] sm:$0xff]
    %v85 = vld [vmem:[#allocation2 + $0x78] sm:$0xff]
    %v88 = vunpack.c.l.b16 %v68
    %v89 = vunpack.c.l.b16 %v69
    %v90 = vpack.c.b16 %v89, %v88
    %v108 = vunpack.c.l.b16 %v70
    %v109 = vunpack.c.h.b16 %v70
    %v110 = vunpack.c.l.b16 %v71
    %v111 = vunpack.c.h.b16 %v71
    %v112 = vunpack.c.l.b16 %v72
    %v113 = vunpack.c.h.b16 %v72
    %v114 = vunpack.c.l.b16 %v73
    %v115 = vunpack.c.h.b16 %v73
    %v116 = vunpack.c.l.b16 %v74
    %v117 = vunpack.c.h.b16 %v74
    %v118 = vunpack.c.l.b16 %v75
    %v119 = vunpack.c.h.b16 %v75
    %v120 = vunpack.c.l.b16 %v76
    %v121 = vunpack.c.h.b16 %v76
    %v122 = vunpack.c.l.b16 %v77
    %v123 = vunpack.c.h.b16 %v77
    %v124 = vunpack.c.l.b16 %v78
    %v125 = vunpack.c.h.b16 %v78
    %v126 = vunpack.c.l.b16 %v79
    %v127 = vunpack.c.h.b16 %v79
    %v128 = vunpack.c.l.b16 %v80
    %v129 = vunpack.c.h.b16 %v80
    %v130 = vunpack.c.l.b16 %v81
    %v131 = vunpack.c.h.b16 %v81
    %v132 = vunpack.c.l.b16 %v82
    %v133 = vunpack.c.h.b16 %v82
    %v134 = vunpack.c.l.b16 %v83
    %v135 = vunpack.c.h.b16 %v83
    %v136 = vunpack.c.l.b16 %v84
    %v137 = vunpack.c.h.b16 %v84
    %v138 = vunpack.c.l.b16 %v85
    %v139 = vunpack.c.h.b16 %v85
    %v140 = vpack.c.b16 %v110, %v108
    %v141 = vpack.c.b16 %v111, %v109
    %v142 = vpack.c.b16 %v114, %v112
    %v143 = vpack.c.b16 %v115, %v113
    %v144 = vpack.c.b16 %v118, %v116
    %v145 = vpack.c.b16 %v119, %v117
    %v146 = vpack.c.b16 %v122, %v120
    %v147 = vpack.c.b16 %v123, %v121
    %v148 = vpack.c.b16 %v126, %v124
    %v149 = vpack.c.b16 %v127, %v125
    %v150 = vpack.c.b16 %v130, %v128
    %v151 = vpack.c.b16 %v131, %v129
    %v152 = vpack.c.b16 %v134, %v132
    %v153 = vpack.c.b16 %v135, %v133
    %v154 = vpack.c.b16 %v138, %v136
    %v155 = vpack.c.b16 %v139, %v137
    %172 = vmatprep.subr.bf16.mxu0 %v141
    %173 = vmatpush1.bf16.msra.mxu0 %v140
    %174 = vmatprep.subr.bf16.mxu0 %v143
    %175 = vmatpush1.bf16.msra.mxu0 %v142
    %176 = vmatprep.subr.bf16.mxu0 %v145
    %177 = vmatpush1.bf16.msra.mxu0 %v144
    %178 = vmatprep.subr.bf16.mxu0 %v147
    %179 = vmatpush1.bf16.msra.mxu0 %v146
    %180 = vmatprep.subr.bf16.mxu0 %v149
    %181 = vmatpush1.bf16.msra.mxu0 %v148
    %182 = vmatprep.subr.bf16.mxu0 %v151
    %183 = vmatpush1.bf16.msra.mxu0 %v150
    %184 = vmatprep.subr.bf16.mxu0 %v153
    %185 = vmatpush1.bf16.msra.mxu0 %v152
    %186 = vmatprep.subr.bf16.mxu0 %v155
    %187 = vmatpush1.bf16.msra.mxu0 %v154
    %188 = vmatprep.subr.bf16.mxu0 0
    %189 = vmatpush1.bf16.msra.mxu0 0
    %190 = vmatprep.subr.bf16.mxu0 0
    %191 = vmatpush1.bf16.msra.mxu0 0
    %192 = vmatprep.subr.bf16.mxu0 0
    %193 = vmatpush1.bf16.msra.mxu0 0
    %194 = vmatprep.subr.bf16.mxu0 0
    %195 = vmatpush1.bf16.msra.mxu0 0
    %196 = vmatprep.subr.bf16.mxu0 0
    %197 = vmatpush1.bf16.msra.mxu0 0
    %198 = vmatprep.subr.bf16.mxu0 0
    %199 = vmatpush1.bf16.msra.mxu0 0
    %200 = vmatprep.subr.bf16.mxu0 0
    %201 = vmatpush1.bf16.msra.mxu0 0
    %202 = vmatprep.subr.bf16.mxu0 0
    %203 = vmatpush1.bf16.msra.mxu0 0
    %204 = vmatprep.mubr.bf16.mxu0 0
    %205 = vmatmul.mubr.bf16.gmra.mrb[0].mxu0 %v90
    %v206 = vpop.f32.mrb[0].mxu0
    %v207 = vadd.f32 0.0, %v206
    %v208 = vpop.f32.mrb[0].mxu0
    %v209 = vadd.f32 0.0, %v208
    %v210 = vpop.f32.mrb[0].mxu0
    %v211 = vadd.f32 0.0, %v210
    %v212 = vpop.f32.mrb[0].mxu0
    %v213 = vadd.f32 0.0, %v212
    %214 = vdwg.mxu0
    %v215 = vpack.c.bf16 %v211, %v207
    %v216 = vpack.c.bf16 %v213, %v209
    %v217 = vld [vmem:[%s2] sm:$0x3]
    %v219 = vlaneseq
    %v220 = vshrl.u32 %v219, 7
    %v221 = vsub.s32 0, %v220
    %v222 = vrot.slane %v217, %v221
    %v223 = vlaneseq
    %v224 = vshrl.u32 %v223, 7
    %v225 = vsub.s32 1, %v224
    %v226 = vrot.slane %v217, %v225
    %v229 = vpack.c.bf16 %v222, %v222
    %v230 = vpack.c.bf16 %v226, %v226
    %v232 = vpack.i.b16 %v229, %v229
    %v234 = vlaneseq
    %v235 = vshrl.u32 %v234, 7
    %v236 = vsub.s32 0, %v235
    %v237 = vrot.slane %v232, %v236
    %v239 = vpack.i.b16 %v230, %v230
    %v241 = vlaneseq
    %v242 = vshrl.u32 %v241, 7
    %v243 = vsub.s32 0, %v242
    %v244 = vrot.slane %v239, %v243
    %v245 = vadd.bf16 %v215, %v237
    %v246 = vadd.bf16 %v216, %v244
    %v247 = vmax.bf16 %v245, 0
    %v248 = vmax.bf16 %v246, 0
    %v249 = vld [vmem:[#allocation4] sm:$0xff]
    %v250 = vld [vmem:[#allocation4 + $0x8] sm:$0xff]
    %v251 = vld [vmem:[#allocation4 + $0x10] sm:$0xff]
    %v252 = vld [vmem:[#allocation4 + $0x18] sm:$0xff]
    %v253 = vld [vmem:[#allocation4 + $0x20] sm:$0xff]
    %v254 = vld [vmem:[#allocation4 + $0x28] sm:$0xff]
    %v255 = vld [vmem:[#allocation4 + $0x30] sm:$0xff]
    %v256 = vld [vmem:[#allocation4 + $0x38] sm:$0xff]
    %v257 = vld [vmem:[#allocation4 + $0x40] sm:$0xff]
    %v258 = vld [vmem:[#allocation4 + $0x48] sm:$0xff]
    %v259 = vld [vmem:[#allocation4 + $0x50] sm:$0xff]
    %v260 = vld [vmem:[#allocation4 + $0x58] sm:$0xff]
    %v261 = vld [vmem:[#allocation4 + $0x60] sm:$0xff]
    %v262 = vld [vmem:[#allocation4 + $0x68] sm:$0xff]
    %v263 = vld [vmem:[#allocation4 + $0x70] sm:$0xff]
    %v264 = vld [vmem:[#allocation4 + $0x78] sm:$0xff]
    %v265 = vld [vmem:[#allocation4 + $0x80] sm:$0xff]
    %v266 = vld [vmem:[#allocation4 + $0x88] sm:$0xff]
    %v267 = vld [vmem:[#allocation4 + $0x90] sm:$0xff]
    %v268 = vld [vmem:[#allocation4 + $0x98] sm:$0xff]
    %v269 = vld [vmem:[#allocation4 + $0xa0] sm:$0xff]
    %v270 = vld [vmem:[#allocation4 + $0xa8] sm:$0xff]
    %v271 = vld [vmem:[#allocation4 + $0xb0] sm:$0xff]
    %v272 = vld [vmem:[#allocation4 + $0xb8] sm:$0xff]
    %v273 = vld [vmem:[#allocation4 + $0xc0] sm:$0xff]
    %v274 = vld [vmem:[#allocation4 + $0xc8] sm:$0xff]
    %v275 = vld [vmem:[#allocation4 + $0xd0] sm:$0xff]
    %v276 = vld [vmem:[#allocation4 + $0xd8] sm:$0xff]
    %v277 = vld [vmem:[#allocation4 + $0xe0] sm:$0xff]
    %v278 = vld [vmem:[#allocation4 + $0xe8] sm:$0xff]
    %v279 = vld [vmem:[#allocation4 + $0xf0] sm:$0xff]
    %v280 = vld [vmem:[#allocation4 + $0xf8] sm:$0xff]
    %v313 = vunpack.c.l.b16 %v249
    %v314 = vunpack.c.h.b16 %v249
    %v315 = vunpack.c.l.b16 %v250
    %v316 = vunpack.c.h.b16 %v250
    %v317 = vunpack.c.l.b16 %v251
    %v318 = vunpack.c.h.b16 %v251
    %v319 = vunpack.c.l.b16 %v252
    %v320 = vunpack.c.h.b16 %v252
    %v321 = vunpack.c.l.b16 %v253
    %v322 = vunpack.c.h.b16 %v253
    %v323 = vunpack.c.l.b16 %v254
    %v324 = vunpack.c.h.b16 %v254
    %v325 = vunpack.c.l.b16 %v255
    %v326 = vunpack.c.h.b16 %v255
    %v327 = vunpack.c.l.b16 %v256
    %v328 = vunpack.c.h.b16 %v256
    %v329 = vunpack.c.l.b16 %v257
    %v330 = vunpack.c.h.b16 %v257
    %v331 = vunpack.c.l.b16 %v258
    %v332 = vunpack.c.h.b16 %v258
    %v333 = vunpack.c.l.b16 %v259
    %v334 = vunpack.c.h.b16 %v259
    %v335 = vunpack.c.l.b16 %v260
    %v336 = vunpack.c.h.b16 %v260
    %v337 = vunpack.c.l.b16 %v261
    %v338 = vunpack.c.h.b16 %v261
    %v339 = vunpack.c.l.b16 %v262
    %v340 = vunpack.c.h.b16 %v262
    %v341 = vunpack.c.l.b16 %v263
    %v342 = vunpack.c.h.b16 %v263
    %v343 = vunpack.c.l.b16 %v264
    %v344 = vunpack.c.h.b16 %v264
    %v345 = vunpack.c.l.b16 %v265
    %v346 = vunpack.c.h.b16 %v265
    %v347 = vunpack.c.l.b16 %v266
    %v348 = vunpack.c.h.b16 %v266
    %v349 = vunpack.c.l.b16 %v267
    %v350 = vunpack.c.h.b16 %v267
    %v351 = vunpack.c.l.b16 %v268
    %v352 = vunpack.c.h.b16 %v268
    %v353 = vunpack.c.l.b16 %v269
    %v354 = vunpack.c.h.b16 %v269
    %v355 = vunpack.c.l.b16 %v270
    %v356 = vunpack.c.h.b16 %v270
    %v357 = vunpack.c.l.b16 %v271
    %v358 = vunpack.c.h.b16 %v271
    %v359 = vunpack.c.l.b16 %v272
    %v360 = vunpack.c.h.b16 %v272
    %v361 = vunpack.c.l.b16 %v273
    %v362 = vunpack.c.h.b16 %v273
    %v363 = vunpack.c.l.b16 %v274
    %v364 = vunpack.c.h.b16 %v274
    %v365 = vunpack.c.l.b16 %v275
    %v366 = vunpack.c.h.b16 %v275
    %v367 = vunpack.c.l.b16 %v276
    %v368 = vunpack.c.h.b16 %v276
    %v369 = vunpack.c.l.b16 %v277
    %v370 = vunpack.c.h.b16 %v277
    %v371 = vunpack.c.l.b16 %v278
    %v372 = vunpack.c.h.b16 %v278
    %v373 = vunpack.c.l.b16 %v279
    %v374 = vunpack.c.h.b16 %v279
    %v375 = vunpack.c.l.b16 %v280
    %v376 = vunpack.c.h.b16 %v280
    %v377 = vpack.c.b16 %v315, %v313
    %v378 = vpack.c.b16 %v316, %v314
    %v379 = vpack.c.b16 %v319, %v317
    %v380 = vpack.c.b16 %v320, %v318
    %v381 = vpack.c.b16 %v323, %v321
    %v382 = vpack.c.b16 %v324, %v322
    %v383 = vpack.c.b16 %v327, %v325
    %v384 = vpack.c.b16 %v328, %v326
    %v385 = vpack.c.b16 %v331, %v329
    %v386 = vpack.c.b16 %v332, %v330
    %v387 = vpack.c.b16 %v335, %v333
    %v388 = vpack.c.b16 %v336, %v334
    %v389 = vpack.c.b16 %v339, %v337
    %v390 = vpack.c.b16 %v340, %v338
    %v391 = vpack.c.b16 %v343, %v341
    %v392 = vpack.c.b16 %v344, %v342
    %v393 = vpack.c.b16 %v347, %v345
    %v394 = vpack.c.b16 %v348, %v346
    %v395 = vpack.c.b16 %v351, %v349
    %v396 = vpack.c.b16 %v352, %v350
    %v397 = vpack.c.b16 %v355, %v353
    %v398 = vpack.c.b16 %v356, %v354
    %v399 = vpack.c.b16 %v359, %v357
    %v400 = vpack.c.b16 %v360, %v358
    %v401 = vpack.c.b16 %v363, %v361
    %v402 = vpack.c.b16 %v364, %v362
    %v403 = vpack.c.b16 %v367, %v365
    %v404 = vpack.c.b16 %v368, %v366
    %v405 = vpack.c.b16 %v371, %v369
    %v406 = vpack.c.b16 %v372, %v370
    %v407 = vpack.c.b16 %v375, %v373
    %v408 = vpack.c.b16 %v376, %v374
    %441 = vmatprep.subr.bf16.mxu0 %v378
    %442 = vmatpush1.bf16.msra.mxu0 %v377
    %443 = vmatprep.subr.bf16.mxu0 %v380
    %444 = vmatpush1.bf16.msra.mxu0 %v379
    %445 = vmatprep.subr.bf16.mxu0 %v382
    %446 = vmatpush1.bf16.msra.mxu0 %v381
    %447 = vmatprep.subr.bf16.mxu0 %v384
    %448 = vmatpush1.bf16.msra.mxu0 %v383
    %449 = vmatprep.subr.bf16.mxu0 %v386
    %450 = vmatpush1.bf16.msra.mxu0 %v385
    %451 = vmatprep.subr.bf16.mxu0 %v388
    %452 = vmatpush1.bf16.msra.mxu0 %v387
    %453 = vmatprep.subr.bf16.mxu0 %v390
    %454 = vmatpush1.bf16.msra.mxu0 %v389
    %455 = vmatprep.subr.bf16.mxu0 %v392
    %456 = vmatpush1.bf16.msra.mxu0 %v391
    %457 = vmatprep.subr.bf16.mxu0 %v394
    %458 = vmatpush1.bf16.msra.mxu0 %v393
    %459 = vmatprep.subr.bf16.mxu0 %v396
    %460 = vmatpush1.bf16.msra.mxu0 %v395
    %461 = vmatprep.subr.bf16.mxu0 %v398
    %462 = vmatpush1.bf16.msra.mxu0 %v397
    %463 = vmatprep.subr.bf16.mxu0 %v400
    %464 = vmatpush1.bf16.msra.mxu0 %v399
    %465 = vmatprep.subr.bf16.mxu0 %v402
    %466 = vmatpush1.bf16.msra.mxu0 %v401
    %467 = vmatprep.subr.bf16.mxu0 %v404
    %468 = vmatpush1.bf16.msra.mxu0 %v403
    %469 = vmatprep.subr.bf16.mxu0 %v406
    %470 = vmatpush1.bf16.msra.mxu0 %v405
    %471 = vmatprep.subr.bf16.mxu0 %v408
    %472 = vmatpush1.bf16.msra.mxu0 %v407
    %473 = vmatprep.mubr.bf16.mxu0 %v248
    %474 = vmatmul.mubr.bf16.gmra.mrb[0].mxu0 %v247
    %v475 = vpop.f32.mrb[0].mxu0
    %v476 = vadd.f32 0.0, %v475
    %v477 = vpop.f32.mrb[0].mxu0
    %v478 = vadd.f32 0.0, %v477
    %v479 = vpop.f32.mrb[0].mxu0
    %v480 = vadd.f32 0.0, %v479
    %v481 = vpop.f32.mrb[0].mxu0
    %v482 = vadd.f32 0.0, %v481
    %483 = vdwg.mxu0
    %v484 = vpack.c.bf16 %v480, %v476
    %v485 = vpack.c.bf16 %v482, %v478
    %v486 = vld [vmem:[%s4] sm:$0x3]
    %v488 = vlaneseq
    %v489 = vshrl.u32 %v488, 7
    %v490 = vsub.s32 0, %v489
    %v491 = vrot.slane %v486, %v490
    %v492 = vlaneseq
    %v493 = vshrl.u32 %v492, 7
    %v494 = vsub.s32 1, %v493
    %v495 = vrot.slane %v486, %v494
    %v498 = vpack.c.bf16 %v491, %v491
    %v499 = vpack.c.bf16 %v495, %v495
    %v501 = vpack.i.b16 %v498, %v498
    %v503 = vlaneseq
    %v504 = vshrl.u32 %v503, 7
    %v505 = vsub.s32 0, %v504
    %v506 = vrot.slane %v501, %v505
    %v508 = vpack.i.b16 %v499, %v499
    %v510 = vlaneseq
    %v511 = vshrl.u32 %v510, 7
    %v512 = vsub.s32 0, %v511
    %v513 = vrot.slane %v508, %v512
    %v514 = vadd.bf16 %v484, %v506
    %v515 = vadd.bf16 %v485, %v513
    %v516 = vmax.bf16 %v514, 0
    %v517 = vmax.bf16 %v515, 0
    %v518 = vld [vmem:[#allocation6] sm:$0xf]
    %v519 = vld [vmem:[#allocation6 + $0x4] sm:$0xf]
    %v520 = vld [vmem:[#allocation6 + $0x8] sm:$0xf]
    %v521 = vld [vmem:[#allocation6 + $0xc] sm:$0xf]
    %v522 = vld [vmem:[#allocation6 + $0x10] sm:$0xf]
    %v523 = vld [vmem:[#allocation6 + $0x14] sm:$0xf]
    %v524 = vld [vmem:[#allocation6 + $0x18] sm:$0xf]
    %v525 = vld [vmem:[#allocation6 + $0x1c] sm:$0xf]
    %v526 = vld [vmem:[#allocation6 + $0x20] sm:$0xf]
    %v527 = vld [vmem:[#allocation6 + $0x24] sm:$0xf]
    %v528 = vld [vmem:[#allocation6 + $0x28] sm:$0xf]
    %v529 = vld [vmem:[#allocation6 + $0x2c] sm:$0xf]
    %v530 = vld [vmem:[#allocation6 + $0x30] sm:$0xf]
    %v531 = vld [vmem:[#allocation6 + $0x34] sm:$0xf]
    %v532 = vld [vmem:[#allocation6 + $0x38] sm:$0xf]
    %v533 = vld [vmem:[#allocation6 + $0x3c] sm:$0xf]
    %v534 = vld [vmem:[#allocation6 + $0x40] sm:$0xf]
    %v535 = vld [vmem:[#allocation6 + $0x44] sm:$0xf]
    %v536 = vld [vmem:[#allocation6 + $0x48] sm:$0xf]
    %v537 = vld [vmem:[#allocation6 + $0x4c] sm:$0xf]
    %v538 = vld [vmem:[#allocation6 + $0x50] sm:$0xf]
    %v539 = vld [vmem:[#allocation6 + $0x54] sm:$0xf]
    %v540 = vld [vmem:[#allocation6 + $0x58] sm:$0xf]
    %v541 = vld [vmem:[#allocation6 + $0x5c] sm:$0xf]
    %v542 = vld [vmem:[#allocation6 + $0x60] sm:$0xf]
    %v543 = vld [vmem:[#allocation6 + $0x64] sm:$0xf]
    %v544 = vld [vmem:[#allocation6 + $0x68] sm:$0xf]
    %v545 = vld [vmem:[#allocation6 + $0x6c] sm:$0xf]
    %v546 = vld [vmem:[#allocation6 + $0x70] sm:$0xf]
    %v547 = vld [vmem:[#allocation6 + $0x74] sm:$0xf]
    %v548 = vld [vmem:[#allocation6 + $0x78] sm:$0xf]
    %v549 = vld [vmem:[#allocation6 + $0x7c] sm:$0xf]
    %v582 = vunpack.c.l.b16 %v518
    %v583 = vunpack.c.l.b16 %v519
    %v584 = vunpack.c.l.b16 %v520
    %v585 = vunpack.c.l.b16 %v521
    %v586 = vunpack.c.l.b16 %v522
    %v587 = vunpack.c.l.b16 %v523
    %v588 = vunpack.c.l.b16 %v524
    %v589 = vunpack.c.l.b16 %v525
    %v590 = vunpack.c.l.b16 %v526
    %v591 = vunpack.c.l.b16 %v527
    %v592 = vunpack.c.l.b16 %v528
    %v593 = vunpack.c.l.b16 %v529
    %v594 = vunpack.c.l.b16 %v530
    %v595 = vunpack.c.l.b16 %v531
    %v596 = vunpack.c.l.b16 %v532
    %v597 = vunpack.c.l.b16 %v533
    %v598 = vunpack.c.l.b16 %v534
    %v599 = vunpack.c.l.b16 %v535
    %v600 = vunpack.c.l.b16 %v536
    %v601 = vunpack.c.l.b16 %v537
    %v602 = vunpack.c.l.b16 %v538
    %v603 = vunpack.c.l.b16 %v539
    %v604 = vunpack.c.l.b16 %v540
    %v605 = vunpack.c.l.b16 %v541
    %v606 = vunpack.c.l.b16 %v542
    %v607 = vunpack.c.l.b16 %v543
    %v608 = vunpack.c.l.b16 %v544
    %v609 = vunpack.c.l.b16 %v545
    %v610 = vunpack.c.l.b16 %v546
    %v611 = vunpack.c.l.b16 %v547
    %v612 = vunpack.c.l.b16 %v548
    %v613 = vunpack.c.l.b16 %v549
    %v614 = vpack.c.b16 %v583, %v582
    %v615 = vpack.c.b16 %v585, %v584
    %v616 = vpack.c.b16 %v587, %v586
    %v617 = vpack.c.b16 %v589, %v588
    %v618 = vpack.c.b16 %v591, %v590
    %v619 = vpack.c.b16 %v593, %v592
    %v620 = vpack.c.b16 %v595, %v594
    %v621 = vpack.c.b16 %v597, %v596
    %v622 = vpack.c.b16 %v599, %v598
    %v623 = vpack.c.b16 %v601, %v600
    %v624 = vpack.c.b16 %v603, %v602
    %v625 = vpack.c.b16 %v605, %v604
    %v626 = vpack.c.b16 %v607, %v606
    %v627 = vpack.c.b16 %v609, %v608
    %v628 = vpack.c.b16 %v611, %v610
    %v629 = vpack.c.b16 %v613, %v612
    %646 = vmatprep.subr.bf16.mxu0 0
    %647 = vmatpush1.bf16.msra.mxu0 %v614
    %648 = vmatprep.subr.bf16.mxu0 0
    %649 = vmatpush1.bf16.msra.mxu0 %v615
    %650 = vmatprep.subr.bf16.mxu0 0
    %651 = vmatpush1.bf16.msra.mxu0 %v616
    %652 = vmatprep.subr.bf16.mxu0 0
    %653 = vmatpush1.bf16.msra.mxu0 %v617
    %654 = vmatprep.subr.bf16.mxu0 0
    %655 = vmatpush1.bf16.msra.mxu0 %v618
    %656 = vmatprep.subr.bf16.mxu0 0
    %657 = vmatpush1.bf16.msra.mxu0 %v619
    %658 = vmatprep.subr.bf16.mxu0 0
    %659 = vmatpush1.bf16.msra.mxu0 %v620
    %660 = vmatprep.subr.bf16.mxu0 0
    %661 = vmatpush1.bf16.msra.mxu0 %v621
    %662 = vmatprep.subr.bf16.mxu0 0
    %663 = vmatpush1.bf16.msra.mxu0 %v622
    %664 = vmatprep.subr.bf16.mxu0 0
    %665 = vmatpush1.bf16.msra.mxu0 %v623
    %666 = vmatprep.subr.bf16.mxu0 0
    %667 = vmatpush1.bf16.msra.mxu0 %v624
    %668 = vmatprep.subr.bf16.mxu0 0
    %669 = vmatpush1.bf16.msra.mxu0 %v625
    %670 = vmatprep.subr.bf16.mxu0 0
    %671 = vmatpush1.bf16.msra.mxu0 %v626
    %672 = vmatprep.subr.bf16.mxu0 0
    %673 = vmatpush1.bf16.msra.mxu0 %v627
    %674 = vmatprep.subr.bf16.mxu0 0
    %675 = vmatpush1.bf16.msra.mxu0 %v628
    %676 = vmatprep.subr.bf16.mxu0 0
    %677 = vmatpush1.bf16.msra.mxu0 %v629
    %678 = vmatprep.mubr.bf16.mxu0 %v517
    %679 = vmatmul.mubr.bf16.gmra.mrb[0].mxu0 %v516
    %v680 = vpop.f32.mrb[0].mxu0
    %v681 = vadd.f32 0.0, %v680
    %v682 = vpop.f32.mrb[0].mxu0
    %v683 = vpop.f32.mrb[0].mxu0
    %v684 = vadd.f32 0.0, %v683
    %v685 = vpop.f32.mrb[0].mxu0
    %686 = vdwg.mxu0
    %v687 = vld [vmem:[%s6] sm:$0x1]
    %v689 = vlaneseq
    %v690 = vshrl.u32 %v689, 7
    %v691 = vsub.s32 0, %v690
    %v692 = vrot.slane %v687, %v691
    %v694 = vadd.f32 %v681, %v692
    %v695 = vadd.f32 %v684, %v692
    %v696 = vtanh.pop %v694
    %v697 = vtanh.pop %v695
    %v698 = vmul.f32 %v696, 2.0
    %v699 = vmul.f32 %v697, 2.0
    %vm700 = vcmask 64512
    %701 = vst.msk [vmem:[%s7] sm:$0xff] %vm700, %v698
    %702 = vst.msk [vmem:[%s7 + $0x8] sm:$0xff] %vm700, %v699
    // Predicated region
    $region42: #{_actor_forward_jit.1} parent=1 // pred_check
      _
    $region43: #{_actor_forward_jit.1} parent=1 // pred_check_branch
      %704 = sbr.rel (0) target = $region45
    $region44: #{_actor_forward_jit.1} parent=1 // pred_region
      _
    $region45: #{_actor_forward_jit.1} parent=1 // pred_fallthru
      _
    // Predicated region
    $region46: #{_actor_forward_jit.1} parent=1 // pred_check
      _
    $region47: #{_actor_forward_jit.1} parent=1 // pred_check_branch
      %706 = sbr.rel (0) target = $region49
    $region48: #{_actor_forward_jit.1} parent=1 // pred_region
      _
    $region49: #{_actor_forward_jit.1} parent=1 // pred_fallthru
      _
    %707 = vsyncpa [#allocation3], 1
    %708 = vsyncpa [#allocation5], 1

</llo_original>
